<compile_context>
chip_gen: v6e
topology: v6e:2x2x1
jax: 0.10.0
libtpu: 0.0.40
codegen_flags: <defaults>
</compile_context>

<pallas_src>
import math

import jax
import jax.numpy as jnp
from jax.experimental import pallas as pl
from jax.experimental.pallas import tpu as pltpu


def _noise_copy_kernel(noise_ref, out_ref):
    # Identity forward: out = noise (elementwise copy of the current tile).
    out_ref[...] = noise_ref[...]


def _min_row_tile(itemsize: int) -> int:
    # Native tile second-to-last dim: 8 (f32), 16 (bf16), 32 (int8/fp8).
    return max(8, 8 * (4 // max(1, itemsize)))


def _choose_2d_layout(total: int, min_rows: int):
    """`total` must be a multiple of 128.  Prefer the widest lane-dense cols
    that still leaves >= min_rows rows (so the row grid has >= 2 blocks and
    both v7x TensorCores can participate); otherwise the widest divisor."""
    first = None
    for cols in (2048, 1024, 512, 256, 128):
        if total % cols == 0:
            rows = total // cols
            if first is None:
                first = (rows, cols)
            if rows >= min_rows:
                return rows, cols
    return first  # total is a multiple of 128, so `first` is never None here


def _choose_row_tile(rows: int, cols: int, itemsize: int, min_tr: int) -> int:
    """Row tile: a multiple of the dtype-native sublane count, <= ~4 MiB per
    tile (safe for v7x's 64 MiB VMEM / 32 MiB scoped default), yielding at
    least 2 grid blocks whenever `rows` allows it."""
    max_tile_bytes = 4 * 1024 * 1024
    tr_cap = max(min_tr,
                 (max_tile_bytes // max(1, cols * itemsize)) // min_tr * min_tr)
    if rows < 2 * min_tr:
        return rows  # single full-extent block (block == full array is legal)
    limit = min(tr_cap, rows // 2)
    best = None
    tr = min_tr
    while tr <= limit:
        if rows % tr == 0:
            best = tr
        tr += min_tr
    if best is not None:
        return best
    # Non-divisor fallback: pl.cdiv grid + masked partial last block.
    return max(min_tr, (limit // min_tr) * min_tr) if limit >= min_tr else min_tr


def _noise_materialize_impl(noise_param: jax.Array) -> jax.Array:
    """Tiled, pipelined Pallas copy producing a fresh buffer with the same
    contents as `noise_param` (bandwidth-only op)."""
    orig_shape = noise_param.shape
    dtype = noise_param.dtype
    itemsize = jnp.dtype(dtype).itemsize
    total = int(math.prod(orig_shape)) if orig_shape else 1

    min_tr = _min_row_tile(itemsize)

    # Lane-dense layout; pad the flat view to a multiple of 128 if needed so we
    # never fall back to one giant un-pipelined block.
    padded_total = ((total + 127) // 128) * 128
    flat = noise_param.reshape(-1)
    if padded_total != total:
        flat = jnp.pad(flat, (0, padded_total - total))

    rows, cols = _choose_2d_layout(padded_total, 2 * min_tr)
    x2d = flat.reshape(rows, cols)

    tr = _choose_row_tile(rows, cols, itemsize, min_tr)
    grid = (pl.cdiv(rows, tr),)

    tile_bytes = tr * cols * itemsize
    # 2x(in) + 2x(out) double-buffered tiles + slack, clamped to sane bounds.
    vmem_limit = min(64 * 1024 * 1024,
                     max(16 * 1024 * 1024, 4 * tile_bytes + (2 << 20)))

    out2d = pl.pallas_call(
        _noise_copy_kernel,
        out_shape=jax.ShapeDtypeStruct((rows, cols), dtype),
        grid_spec=pltpu.PrefetchScalarGridSpec(
            num_scalar_prefetch=0,
            grid=grid,
            in_specs=[pl.BlockSpec((tr, cols), lambda i: (i, 0))],
            out_specs=pl.BlockSpec((tr, cols), lambda i: (i, 0)),
        ),
        compiler_params=pltpu.CompilerParams(
            dimension_semantics=("parallel",),
            vmem_limit_bytes=vmem_limit,
        ),
        cost_estimate=pl.CostEstimate(
            flops=0,
            transcendentals=0,
            bytes_accessed=2 * padded_total * itemsize,
        ),
    )(x2d)

    out = out2d.reshape(-1)
    if padded_total != total:
        out = out[:total]
    return out.reshape(orig_shape)


# Jit the copy path so pad / reshape / slice fuse around the custom call.
noise_materialize = jax.jit(_noise_materialize_impl)


def noise_forward(noise_param: jax.Array, *, materialize: bool = False) -> jax.Array:
    """Forward pass of the Noise module.

    Default (materialize=False): identity return of the parameter — the
    highest-value optimization, saving 100% of the HBM copy traffic.
    materialize=True: run the Pallas copy kernel to get a distinct buffer.
    """
    if not materialize:
        return noise_param
    return noise_materialize(noise_param)


class NoisePallas:
    """JAX/Pallas equivalent of the PyTorch Noise nn.Module."""

    def __init__(self, batch_size, *dim, key=None):
        if key is None:
            key = jax.random.PRNGKey(0)
        # Deterministic randn-equivalent initialization (torch.randn -> normal).
        self.noise = jax.random.normal(key, (batch_size, *dim), dtype=jnp.float32)

    def __call__(self, *, materialize: bool = False):
        return noise_forward(self.noise, materialize=materialize)


if __name__ == "__main__":
    # Small shapes consistent with typical UNSIR usage: NCHW image-shaped noise.
    batch, C, H, W = 2, 4, 16, 16

    key = jax.random.PRNGKey(0)
    module = NoisePallas(batch, C, H, W, key=key)

    # Default forward: identity (zero-copy).
    out_identity = module()
    out_identity = jax.block_until_ready(out_identity)
    assert out_identity.shape == (batch, C, H, W), out_identity.shape
    assert bool(jnp.array_equal(out_identity, module.noise))

    # Exercise the Pallas copy kernel (distinct materialized buffer).
    out = module(materialize=True)
    out = jax.block_until_ready(out)

    assert out.shape == (batch, C, H, W), out.shape
    assert out.dtype == jnp.float32
    assert bool(jnp.array_equal(out, module.noise))

    print("KERNEL_OK")
</pallas_src>

<mosaic_0001>
module attributes {stable_mosaic.version = 11 : i64} {
  func.func @_noise_copy_kernel(%arg0: i32, %arg1: memref<8x128xf32, #tpu.memory_space<vmem>>, %arg2: memref<8x128xf32, #tpu.memory_space<vmem>>) attributes {dimension_semantics = [#tpu.dimension_semantics<parallel>], iteration_bounds = array<i64: 2>, scalar_prefetch = 0 : i64, scratch_operands = 0 : i64, tpu.core_type = #tpu.core_type<tc>, window_params = [{transform_indices = @transform_0, window_bounds = array<i64: 8, 128>}, {transform_indices = @transform_1, window_bounds = array<i64: 8, 128>}]} {
    %c0 = arith.constant 0 : index
    %c0_0 = arith.constant 0 : index
    %0 = vector.load %arg1[%c0, %c0_0] : memref<8x128xf32, #tpu.memory_space<vmem>>, vector<8x128xf32>
    %c0_1 = arith.constant 0 : index
    %c0_2 = arith.constant 0 : index
    %1 = vector.load %arg2[%c0_1, %c0_2] : memref<8x128xf32, #tpu.memory_space<vmem>>, vector<8x128xf32>
    tpu.vector_store %arg2[%c0_1, %c0_2], %0 {strides = array<i32>} : memref<8x128xf32, #tpu.memory_space<vmem>>, vector<8x128xf32>,
    return
  }
  func.func @transform_0(%arg0: i32) -> (i32, i32) {
    %c0_i32 = arith.constant 0 : i32
    %c0_i32_0 = arith.constant 0 : i32
    return %arg0, %c0_i32 : i32, i32
  }
  func.func @transform_1(%arg0: i32) -> (i32, i32) {
    %c0_i32 = arith.constant 0 : i32
    %c0_i32_0 = arith.constant 0 : i32
    return %arg0, %c0_i32 : i32, i32
  }
}

</mosaic_0001>

<llo_original>
// kernel: _noise_materialize_impl.1
$region0: #{_noise_materialize_impl.1}
  #allocation0 [shape = 'u32[]', space=smem, size = 0x4, offset = 0x4, fixed_abs, tag = 'smem constant byte address 0x4 - core index']
  #allocation1 [shape = 'u32[144,128]{1,0:T(1,128)}', space=vmem, size = 0x12000, scoped, tag = 'internal scratch']
  %s0 = inlined_call_operand.vmem [shape: f32[16,128], index: 0, kind: input, shape index: {}]
  %s1 = inlined_call_operand.vmem [shape: f32[16,128], index: 1, kind: output, shape index: {}]
  %s2 = sld [smem:[#allocation0]]
  $region37: #{_noise_materialize_impl.1} parent=0
    _
  %s4 = ssub.s32 1, %s2
  %s5 = scalar_select 0, %s4, %s2
  loop: start=0, step=1, limit=4
  $region2: #{_noise_materialize_impl.1} parent=0 // loop_pre_header
    _
  $region3: #{_noise_materialize_impl.1} parent=0 // loop_header
    %s7 = sphi 0, %s11
    %p8 = scmp.ge.s32.totalorder %s7, 4
    %s17 = sphi 0, %s19
    %s20 = sphi 0, %s17
    %s21 = sphi 0, %s20
    %s37 = sphi 0, %s21
    %s43 = sphi 0, %s45
    %s46 = sphi 0, %s43
    %s47 = sphi 0, %s46
    %s63 = sphi 0, %s47
  $region4: #{_noise_materialize_impl.1} parent=0 // loop_header_branch
    %10 = sbr.rel (%p8) target = $region8
  $region5: #{_noise_materialize_impl.1} parent=0 // loop_body
    %s12 = ssub.s32 %s7, 1
    %s13 = ssub.s32 %s7, 2
    %s14 = sadd.s32 %s7, 1
    %s15 = ssub.s32 %s7, %s14
    %p16 = scmp.eq.s32.totalorder %s15, 0
    %s18 = sadd.s32 %s17, 1
    %s19 = scalar_select %p16, %s17, %s18
    %p22 = pneg %p16
    %p23 = scmp.eq.s32.totalorder %s7, 1
    %p24 = por %p22, %p23
    %p25 = scmp.ne.s32.totalorder %s17, %s20
    %p26 = scmp.eq.s32.totalorder %s7, 0
    %p27 = por %p25, %p26
    %p28 = scmp.ne.s32.totalorder %s17, %s20
    %p29 = scmp.eq.s32.totalorder %s12, 1
    %p30 = por %p28, %p29
    %p31 = scmp.ne.s32.totalorder %s20, %s21
    %p32 = scmp.eq.s32.totalorder %s12, 0
    %p33 = por %p31, %p32
    %p34 = scmp.ne.s32.totalorder %s20, %s21
    %p35 = scmp.eq.s32.totalorder %s13, 1
    %p36 = por %p34, %p35
    %p38 = scmp.ne.s32.totalorder %s21, %s37
    %p39 = scmp.eq.s32.totalorder %s13, 0
    %p40 = por %p38, %p39
    %s41 = ssub.s32 %s7, %s14
    %p42 = scmp.eq.s32.totalorder %s41, 0
    %s44 = sadd.s32 %s43, 1
    %s45 = scalar_select %p42, %s43, %s44
    %p48 = pneg %p42
    %p49 = scmp.eq.s32.totalorder %s7, 1
    %p50 = por %p48, %p49
    %p51 = scmp.ne.s32.totalorder %s43, %s46
    %p52 = scmp.eq.s32.totalorder %s7, 0
    %p53 = por %p51, %p52
    %p54 = scmp.ne.s32.totalorder %s43, %s46
    %p55 = scmp.eq.s32.totalorder %s12, 1
    %p56 = por %p54, %p55
    %p57 = scmp.ne.s32.totalorder %s46, %s47
    %p58 = scmp.eq.s32.totalorder %s12, 0
    %p59 = por %p57, %p58
    %p60 = scmp.ne.s32.totalorder %s46, %s47
    %p61 = scmp.eq.s32.totalorder %s13, 1
    %p62 = por %p60, %p61
    %p64 = scmp.ne.s32.totalorder %s47, %s63
    %p65 = scmp.eq.s32.totalorder %s13, 0
    %p66 = por %p64, %p65
    %p67 = scmp.le.s32.totalorder 1, %s7
    %p68 = scmp.lt.s32.totalorder %s7, 3
    %p69 = pnand %p67, %p68
    %p70 = pneg %p69
    // Predicated region
    $region9: #{_noise_materialize_impl.1} parent=5 // pred_check
      _
    $region10: #{_noise_materialize_impl.1} parent=5 // pred_check_branch
      %72 = sbr.rel (%p69) target = $region12
    $region11: #{_noise_materialize_impl.1} parent=5 // pred_region
      %s73 = ssub.s32 %s7, 1
    $region12: #{_noise_materialize_impl.1} parent=5 // pred_fallthru
      _
    %p74 = scmp.lt.s32.totalorder %s7, 2
    // Predicated region
    $region13: #{_noise_materialize_impl.1} parent=5 // pred_check
      %p75 = pneg %p74
    $region14: #{_noise_materialize_impl.1} parent=5 // pred_check_branch
      %77 = sbr.rel (%p75) target = $region16
    $region15: #{_noise_materialize_impl.1} parent=5 // pred_region
      // Predicated region
      $region17: #{_noise_materialize_impl.1} parent=15 // pred_check
        %p78 = pneg %p27
      $region18: #{_noise_materialize_impl.1} parent=15 // pred_check_branch
        %80 = sbr.rel (%p78) target = $region20
      $region19: #{_noise_materialize_impl.1} parent=15 // pred_region
        %p81 = scmp.lt.s32.totalorder %s7, 1
        %s82 = scalar_select %p81, %s7, 1
        %s83 = smul.addr %s82, 8
        %s84 = scalar_lea.vmem %s0, %s83
      $region20: #{_noise_materialize_impl.1} parent=15 // pred_fallthru
        _
    $region16: #{_noise_materialize_impl.1} parent=5 // pred_fallthru
      _
    %p85 = scmp.le.s32.totalorder 1, %s7
    %p86 = scmp.lt.s32.totalorder %s7, 3
    %p87 = pnand %p85, %p86
    %p88 = pneg %p87
    // Predicated region
    $region21: #{_noise_materialize_impl.1} parent=5 // pred_check
      _
    $region22: #{_noise_materialize_impl.1} parent=5 // pred_check_branch
      %90 = sbr.rel (%p87) target = $region24
    $region23: #{_noise_materialize_impl.1} parent=5 // pred_region
      %s91 = ssub.s32 %s7, 1
      %p92 = scmp.lt.s32.totalorder %s12, 1
      %s93 = scalar_select %p92, %s12, 1
      %s94 = smul.addr %s93, 8
      %s95 = scalar_lea.vmem %s0, %s94
      %p96 = pneg %p33
      %p97 = pneg %p30
      %p98 = pneg %p59
      %p99 = pneg %p56
      %p100 = scmp.lt.s32.totalorder %s12, 1
      %s101 = scalar_select %p100, %s12, 1
      %s102 = smul.addr %s101, 8
      %s103 = scalar_lea.vmem %s1, %s102
      %p104 = scmp.lt.s32.totalorder %s12, 1
      %s105 = scalar_select %p104, %s12, 1
      %s106 = smul.addr %s105, 8
      %s107 = scalar_lea.vmem %s0, %s106
      %p108 = scmp.lt.s32.totalorder %s12, 1
      %s109 = scalar_select %p108, %s12, 1
      %s110 = smul.addr %s109, 8
      %s111 = scalar_lea.vmem %s1, %s110
      %v112 = vld [vmem:[%s107] sm:$0xff]
      %113 = vst [vmem:[%s111] sm:$0xff] %v112
      %p114 = scmp.lt.s32.totalorder %s12, 1
      %s115 = scalar_select %p114, %s12, 1
      %s116 = smul.addr %s115, 8
      %s117 = scalar_lea.vmem %s1, %s116
      // Predicated region
      $region25: #{_noise_materialize_impl.1} parent=23 // pred_check
        %p118 = pneg %p56
      $region26: #{_noise_materialize_impl.1} parent=23 // pred_check_branch
        %120 = sbr.rel (%p118) target = $region28
      $region27: #{_noise_materialize_impl.1} parent=23 // pred_region
        _
      $region28: #{_noise_materialize_impl.1} parent=23 // pred_fallthru
        _
    $region24: #{_noise_materialize_impl.1} parent=5 // pred_fallthru
      _
    %p121 = scmp.le.s32.totalorder 2, %s7
    // Predicated region
    $region29: #{_noise_materialize_impl.1} parent=5 // pred_check
      %p122 = pneg %p121
    $region30: #{_noise_materialize_impl.1} parent=5 // pred_check_branch
      %124 = sbr.rel (%p122) target = $region32
    $region31: #{_noise_materialize_impl.1} parent=5 // pred_region
      %s125 = ssub.s32 %s7, 2
      // Predicated region
      $region33: #{_noise_materialize_impl.1} parent=31 // pred_check
        %p126 = pneg %p62
      $region34: #{_noise_materialize_impl.1} parent=31 // pred_check_branch
        %128 = sbr.rel (%p126) target = $region36
      $region35: #{_noise_materialize_impl.1} parent=31 // pred_region
        %p129 = scmp.lt.s32.totalorder %s13, 1
        %s130 = scalar_select %p129, %s13, 1
        %s131 = smul.addr %s130, 8
        %s132 = scalar_lea.vmem %s1, %s131
      $region36: #{_noise_materialize_impl.1} parent=31 // pred_fallthru
        _
    $region32: #{_noise_materialize_impl.1} parent=5 // pred_fallthru
      _
  $region6: #{_noise_materialize_impl.1} parent=0 // loop_footer
    %s11 = sadd.s32 1, %s7
  $region7: #{_noise_materialize_impl.1} parent=0 // loop_footer_branch
    %6 = sbr.rel target = $region3
  $region8: #{_noise_materialize_impl.1} parent=0 // loop_exit
    _

</llo_original>
